<compile_context>
chip_gen: v5e
topology: v5e:2x2
jax: 0.10.0
libtpu: 0.0.40
codegen_flags: <defaults>
</compile_context>

<pallas_src>
import functools

import numpy as np
import jax
import jax.numpy as jnp
from jax.experimental import pallas as pl
from jax.experimental.pallas import tpu as pltpu


# ------------------------- host-side constant folding ------------------------

def _bit_tables(n_qubits):
    """bits[q, j] = bit of wire q in basis index j (wire 0 = most significant)."""
    D = 2 ** n_qubits
    idx = np.arange(D)
    return np.stack([(idx >> (n_qubits - 1 - q)) & 1 for q in range(n_qubits)], 0)


def _fold_entangling_unitary_np(q_params, n_qubits):
    """Fold all StronglyEntanglingLayers gates (Rot sweeps + CNOT rings) into one
    D x D unitary.  Pure numpy / float64: runs once on the host, never traced."""
    D = 2 ** n_qubits
    q_depth = q_params.shape[0]
    idx = np.arange(D)
    U = np.eye(D, dtype=np.complex128)           # ket convention: |out> = U |in>
    for l in range(q_depth):
        for q in range(n_qubits):
            phi = float(q_params[l, q, 0])
            theta = float(q_params[l, q, 1])
            omega = float(q_params[l, q, 2])
            c, s = np.cos(theta / 2.0), np.sin(theta / 2.0)
            rot = np.array(
                [[np.exp(-0.5j * (phi + omega)) * c, -np.exp(0.5j * (phi - omega)) * s],
                 [np.exp(-0.5j * (phi - omega)) * s,  np.exp(0.5j * (phi + omega)) * c]],
                dtype=np.complex128)
            gate = np.kron(np.eye(2 ** q, dtype=np.complex128),
                           np.kron(rot, np.eye(2 ** (n_qubits - 1 - q),
                                               dtype=np.complex128)))
            U = gate @ U
        if n_qubits > 1:
            r = (l % (n_qubits - 1)) + 1
            for ctrl in range(n_qubits):
                tgt = (ctrl + r) % n_qubits
                ctrl_bit = (idx >> (n_qubits - 1 - ctrl)) & 1
                new_idx = np.where(ctrl_bit == 1,
                                   idx ^ (1 << (n_qubits - 1 - tgt)), idx)
                cnot = np.zeros((D, D), np.complex128)
                cnot[new_idx, idx] = 1.0
                U = cnot @ U
    return U


def make_qnn_constants(params, n_qubits):
    """Precompute all folded constant tables (numpy, float64) once.

    Returns (wpre_aug_t, tabc, tabs, mstack_t, wz_t) as float32 device arrays.
    Callers doing repeated inference should cache this result and pass it via
    quantum_neural_network(..., constants=...)."""
    wpre, bpre, q_params, wpost, bpost = params
    wpre = np.asarray(wpre, np.float64)                       # (nf, nq)
    bpre = np.asarray(bpre, np.float64).reshape(1, -1)        # (1, nq)
    qp = np.asarray(q_params, np.float64)                     # (depth, nq, 3)
    wpost = np.asarray(wpost, np.float64)                     # (nq, n_out)
    bpost = np.asarray(bpost, np.float64).reshape(1, -1)      # (1, n_out)

    nq = n_qubits
    D = 2 ** nq
    bits = _bit_tables(nq)                                    # (nq, D)

    # pre_net weight with bias folded in (x gets an appended ones row): (nq, nf+1)
    wpre_aug_t = np.concatenate([wpre.T, bpre.T], axis=1)

    # RX product-state factor tables:  fac = tabc @ cos(a/2) + tabs @ sin(a/2)
    # fac[q*D + j, b] = cos(a_qb/2) if bit_q(j)==0 else sin(a_qb/2)
    tabc = np.zeros((nq * D, nq), np.float64)
    tabs = np.zeros((nq * D, nq), np.float64)
    for q in range(nq):
        tabc[q * D:(q + 1) * D, q] = (bits[q] == 0).astype(np.float64)
        tabs[q * D:(q + 1) * D, q] = (bits[q] == 1).astype(np.float64)

    # Whole entangling block + (-i)^popcount embedding phase, stacked Re/Im, transposed:
    #   [Re(psi_out); Im(psi_out)] (2D, TB) = mstack_t @ prod (D, TB)
    U = _fold_entangling_unitary_np(qp, nq)
    k = bits.sum(0) % 4
    z_sign = np.array([1.0, -1.0j, -1.0, 1.0j], np.complex128)[k]   # (-i)^popcount
    Mt = U * z_sign[None, :]                                        # (D, D)
    mstack_t = np.concatenate([Mt.real, Mt.imag], axis=0)           # (2D, D)

    # PauliZ signs + post_net weight + post_net bias folded into one matrix.
    # Bias fold is exact: sum over the stacked 2D rows of (st*st) is the state norm == 1.
    signz_t = (1.0 - 2.0 * bits).T                                  # (D, nq)
    signz2 = np.concatenate([signz_t, signz_t], axis=0)             # (2D, nq)
    wz_t = (signz2 @ wpost + bpost).T                               # (n_out, 2D)

    f32 = lambda a: jnp.asarray(a, jnp.float32)
    return (f32(wpre_aug_t), f32(tabc), f32(tabs), f32(mstack_t), f32(wz_t))


# --------------------------------- kernel -----------------------------------

def qnn_kernel(x_ref, wpre_ref, tabc_ref, tabs_ref, mstack_ref, wz_ref, out_ref,
               *, n_qubits, dim):
    # Batch lives on the lane (last) axis for every intermediate.
    # ---- pre_net (bias folded via ones row) + tanh ----
    pre = jnp.dot(wpre_ref[...], x_ref[...],
                  preferred_element_type=jnp.float32)             # (nq, TB)
    half = jnp.tanh(pre) * 0.5

    # ---- RX product-state amplitudes: factors built on the MXU ----
    fac = (jnp.dot(tabc_ref[...], jnp.cos(half), preferred_element_type=jnp.float32)
           + jnp.dot(tabs_ref[...], jnp.sin(half),
                     preferred_element_type=jnp.float32))         # (nq*D, TB)
    prod = fac[0:dim, :]
    for q in range(1, n_qubits):                                  # static, 8-aligned slices
        prod = prod * fac[q * dim:(q + 1) * dim, :]               # (D, TB)

    # ---- whole entangling circuit (+ embedding phase): one stacked Re/Im matmul ----
    st = jnp.dot(mstack_ref[...], prod,
                 preferred_element_type=jnp.float32)              # (2D, TB)

    # ---- <Z_q>, post_net weight and bias all folded into wz ----
    logits = jnp.dot(wz_ref[...], st * st,
                     preferred_element_type=jnp.float32)          # (n_out, TB)
    out_ref[...] = jax.nn.sigmoid(logits).astype(out_ref.dtype)   # lane-dense store


# -------------------------------- wrapper ------------------------------------

def _round_up(v, m):
    return ((v + m - 1) // m) * m


def quantum_neural_network(x, params=None, *, n_qubits, q_depth, n_outputs,
                           constants=None, block_b=1024):
    del q_depth  # implied by q_params.shape[0]
    B, n_features = x.shape
    if constants is None:
        constants = make_qnn_constants(params, n_qubits)
    wpre_aug_t, tabc, tabs, mstack_t, wz_t = constants
    D = 2 ** n_qubits
    nf1 = n_features + 1

    # Batch block size (lane axis).  Small B -> one full-width block (lane dim equals
    # the full array dim, so no 128 constraint).  Large B -> at least two blocks, each
    # a multiple of 128 lanes, so v7x's two TensorCores both get grid steps.
    if B <= 256 and B <= block_b:
        TB = B
    else:
        TB = min(block_b, max(128, _round_up(pl.cdiv(B, 2), 128)))
    grid = (pl.cdiv(B, TB),)

    # Transpose to batch-on-lanes and fold the pre_net bias via an appended ones row.
    x_aug_t = jnp.concatenate(
        [jnp.asarray(x, jnp.float32).T, jnp.ones((1, B), jnp.float32)], axis=0)

    const = lambda shape: pl.BlockSpec(shape, lambda i: (0, 0))
    kernel = functools.partial(qnn_kernel, n_qubits=n_qubits, dim=D)

    out_t = pl.pallas_call(
        kernel,
        out_shape=jax.ShapeDtypeStruct((n_outputs, B), jnp.float32),
        grid=grid,
        in_specs=[
            pl.BlockSpec((nf1, TB), lambda i: (0, i)),   # x (augmented, transposed)
            const((n_qubits, nf1)),                      # pre_net weight | bias
            const((n_qubits * D, n_qubits)),             # cos factor table
            const((n_qubits * D, n_qubits)),             # sin factor table
            const((2 * D, D)),                           # folded entangling unitary (Re;Im)
            const((n_outputs, 2 * D)),                   # folded Z signs + post_net (W,b)
        ],
        out_specs=pl.BlockSpec((n_outputs, TB), lambda i: (0, i)),
        compiler_params=pltpu.CompilerParams(
            dimension_semantics=("parallel",)),
    )(x_aug_t, wpre_aug_t, tabc, tabs, mstack_t, wz_t)

    return out_t.T                                        # (B, n_outputs)


# ----------------------- pure-JAX reference (for check) ----------------------

def _reference_forward(x, params, *, n_qubits, q_depth):
    """Gate-by-gate statevector simulation in plain JAX (validates all the folding)."""
    wpre, bpre, q_params, wpost, bpost = params
    nq = n_qubits
    D = 2 ** nq
    B = x.shape[0]
    angles = jnp.tanh(x @ wpre + bpre)                    # (B, nq)

    idx = np.arange(D)
    state = jnp.zeros((B, D), jnp.complex64).at[:, 0].set(1.0)

    def flip_cols(st, wire):
        return st[:, idx ^ (1 << (nq - 1 - wire))]

    # AngleEmbedding: RX(angle_q) on wire q
    for q in range(nq):
        c = jnp.cos(angles[:, q:q + 1] * 0.5).astype(jnp.complex64)
        s = jnp.sin(angles[:, q:q + 1] * 0.5).astype(jnp.complex64)
        state = c * state + (-1j) * s * flip_cols(state, q)

    # StronglyEntanglingLayers
    for l in range(q_depth):
        for q in range(nq):
            phi, theta, omega = (q_params[l, q, 0], q_params[l, q, 1],
                                 q_params[l, q, 2])
            cc = jnp.cos(theta / 2.0)
            ss = jnp.sin(theta / 2.0)
            u00 = jnp.exp(-0.5j * (phi + omega)) * cc
            u01 = -jnp.exp(0.5j * (phi - omega)) * ss
            u10 = jnp.exp(-0.5j * (phi - omega)) * ss
            u11 = jnp.exp(0.5j * (phi + omega)) * cc
            bit = jnp.asarray((idx >> (nq - 1 - q)) & 1)
            a = jnp.where(bit == 0, u00, u11)[None, :]
            b = jnp.where(bit == 0, u01, u10)[None, :]
            state = a * state + b * flip_cols(state, q)
        if nq > 1:
            r = (l % (nq - 1)) + 1
            for ctrl in range(nq):
                tgt = (ctrl + r) % nq
                ctrl_bit = jnp.asarray((idx >> (nq - 1 - ctrl)) & 1)[None, :]
                state = jnp.where(ctrl_bit == 1, flip_cols(state, tgt), state)

    prob = jnp.abs(state) ** 2                            # (B, D)
    bits = np.stack([(idx >> (nq - 1 - q)) & 1 for q in range(nq)], 0)
    signz_t = jnp.asarray((1.0 - 2.0 * bits).astype(np.float32).T)
    q_out = prob @ signz_t
    return jax.nn.sigmoid(q_out @ wpost + bpost)


# --------------------------------- main --------------------------------------

if __name__ == "__main__":
    n_features, n_qubits, q_depth, n_outputs = 32, 4, 2, 1
    batch = 8

    key = jax.random.PRNGKey(0)
    kx, kw1, kb1, kq, kw2, kb2 = jax.random.split(key, 6)

    x = jax.random.normal(kx, (batch, n_features), jnp.float32)

    # Deterministic synthetic parameters (shapes match torch.nn.Linear / q_params).
    lim1 = 1.0 / np.sqrt(n_features)
    wpre = jax.random.uniform(kw1, (n_features, n_qubits), jnp.float32, -lim1, lim1)
    bpre = jax.random.uniform(kb1, (1, n_qubits), jnp.float32, -lim1, lim1)
    q_params = 0.01 * jax.random.normal(kq, (q_depth, n_qubits, 3), jnp.float32)
    lim2 = 1.0 / np.sqrt(n_qubits)
    wpost = jax.random.uniform(kw2, (n_qubits, n_outputs), jnp.float32, -lim2, lim2)
    bpost = jax.random.uniform(kb2, (1, n_outputs), jnp.float32, -lim2, lim2)

    params = (wpre, bpre, q_params, wpost, bpost)

    # Precompute folded constants once (numpy/f64 host fold; cacheable across calls).
    consts = make_qnn_constants(params, n_qubits)

    out = quantum_neural_network(x, params, n_qubits=n_qubits, q_depth=q_depth,
                                 n_outputs=n_outputs, constants=consts)
    out = jax.block_until_ready(out)

    ref = _reference_forward(x, params, n_qubits=n_qubits, q_depth=q_depth)
    ref = jax.block_until_ready(ref)

    assert out.shape == (batch, n_outputs)
    assert bool(jnp.all(jnp.isfinite(out)))
    assert bool(jnp.all((out > 0.0) & (out < 1.0)))  # sigmoid output range
    np.testing.assert_allclose(np.asarray(out), np.asarray(ref),
                               rtol=1e-4, atol=2e-5)
    print("KERNEL_OK")
</pallas_src>

<mosaic_0001>
module attributes {stable_mosaic.version = 11 : i64} {
  func.func @qnn_kernel(%arg0: i32, %arg1: memref<33x8xf32, #tpu.memory_space<vmem>>, %arg2: memref<4x33xf32, #tpu.memory_space<vmem>>, %arg3: memref<64x4xf32, #tpu.memory_space<vmem>>, %arg4: memref<64x4xf32, #tpu.memory_space<vmem>>, %arg5: memref<32x16xf32, #tpu.memory_space<vmem>>, %arg6: memref<1x32xf32, #tpu.memory_space<vmem>>, %arg7: memref<1x8xf32, #tpu.memory_space<vmem>>) attributes {dimension_semantics = [#tpu.dimension_semantics<parallel>], iteration_bounds = array<i64: 1>, scalar_prefetch = 0 : i64, scratch_operands = 0 : i64, tpu.core_type = #tpu.core_type<tc>, window_params = [{transform_indices = @transform_0, window_bounds = array<i64: 33, 8>}, {pipeline_mode = #tpu.pipeline_mode<synchronous>, transform_indices = @transform_1, window_bounds = array<i64: 4, 33>}, {pipeline_mode = #tpu.pipeline_mode<synchronous>, transform_indices = @transform_2, window_bounds = array<i64: 64, 4>}, {pipeline_mode = #tpu.pipeline_mode<synchronous>, transform_indices = @transform_3, window_bounds = array<i64: 64, 4>}, {pipeline_mode = #tpu.pipeline_mode<synchronous>, transform_indices = @transform_4, window_bounds = array<i64: 32, 16>}, {pipeline_mode = #tpu.pipeline_mode<synchronous>, transform_indices = @transform_5, window_bounds = array<i64: 1, 32>}, {transform_indices = @transform_6, window_bounds = array<i64: 1, 8>}]} {
    %c0 = arith.constant 0 : index
    %c0_0 = arith.constant 0 : index
    %0 = vector.load %arg2[%c0, %c0_0] : memref<4x33xf32, #tpu.memory_space<vmem>>, vector<4x33xf32>
    %c0_1 = arith.constant 0 : index
    %c0_2 = arith.constant 0 : index
    %1 = vector.load %arg1[%c0_1, %c0_2] : memref<33x8xf32, #tpu.memory_space<vmem>>, vector<33x8xf32>
    %cst = arith.constant dense<0.000000e+00> : vector<4x8xf32>
    %2 = tpu.matmul %0, %1, %cst {dimension_numbers = #tpu.dot_dimension_numbers<[1], [0], [0], [1], [0, 0, 1, 1], [], []>} : vector<4x33xf32>, vector<33x8xf32>, vector<4x8xf32> -> vector<4x8xf32>
    %3 = math.tanh %2 : vector<4x8xf32>
    %cst_3 = arith.constant 5.000000e-01 : f32
    %4 = vector.broadcast %cst_3 : f32 to vector<4x8xf32>
    %5 = arith.mulf %3, %4 : vector<4x8xf32>
    %c0_4 = arith.constant 0 : index
    %c0_5 = arith.constant 0 : index
    %6 = vector.load %arg3[%c0_4, %c0_5] : memref<64x4xf32, #tpu.memory_space<vmem>>, vector<64x4xf32>
    %7 = math.cos %5 : vector<4x8xf32>
    %cst_6 = arith.constant dense<0.000000e+00> : vector<64x8xf32>
    %8 = tpu.matmul %6, %7, %cst_6 {dimension_numbers = #tpu.dot_dimension_numbers<[1], [0], [0], [1], [0, 0, 1, 1], [], []>} : vector<64x4xf32>, vector<4x8xf32>, vector<64x8xf32> -> vector<64x8xf32>
    %c0_7 = arith.constant 0 : index
    %c0_8 = arith.constant 0 : index
    %9 = vector.load %arg4[%c0_7, %c0_8] : memref<64x4xf32, #tpu.memory_space<vmem>>, vector<64x4xf32>
    %10 = math.sin %5 : vector<4x8xf32>
    %cst_9 = arith.constant dense<0.000000e+00> : vector<64x8xf32>
    %11 = tpu.matmul %9, %10, %cst_9 {dimension_numbers = #tpu.dot_dimension_numbers<[1], [0], [0], [1], [0, 0, 1, 1], [], []>} : vector<64x4xf32>, vector<4x8xf32>, vector<64x8xf32> -> vector<64x8xf32>
    %12 = arith.addf %8, %11 : vector<64x8xf32>
    %13 = vector.extract_strided_slice %12 {offsets = [0, 0], sizes = [16, 8], strides = [1, 1]} : vector<64x8xf32> to vector<16x8xf32>
    %14 = vector.extract_strided_slice %12 {offsets = [16, 0], sizes = [16, 8], strides = [1, 1]} : vector<64x8xf32> to vector<16x8xf32>
    %15 = arith.mulf %13, %14 : vector<16x8xf32>
    %16 = vector.extract_strided_slice %12 {offsets = [32, 0], sizes = [16, 8], strides = [1, 1]} : vector<64x8xf32> to vector<16x8xf32>
    %17 = arith.mulf %15, %16 : vector<16x8xf32>
    %18 = vector.extract_strided_slice %12 {offsets = [48, 0], sizes = [16, 8], strides = [1, 1]} : vector<64x8xf32> to vector<16x8xf32>
    %19 = arith.mulf %17, %18 : vector<16x8xf32>
    %c0_10 = arith.constant 0 : index
    %c0_11 = arith.constant 0 : index
    %20 = vector.load %arg5[%c0_10, %c0_11] : memref<32x16xf32, #tpu.memory_space<vmem>>, vector<32x16xf32>
    %cst_12 = arith.constant dense<0.000000e+00> : vector<32x8xf32>
    %21 = tpu.matmul %20, %19, %cst_12 {dimension_numbers = #tpu.dot_dimension_numbers<[1], [0], [0], [1], [0, 0, 1, 1], [], []>} : vector<32x16xf32>, vector<16x8xf32>, vector<32x8xf32> -> vector<32x8xf32>
    %c0_13 = arith.constant 0 : index
    %c0_14 = arith.constant 0 : index
    %22 = vector.load %arg6[%c0_13, %c0_14] : memref<1x32xf32, #tpu.memory_space<vmem>>, vector<1x32xf32>
    %23 = arith.mulf %21, %21 : vector<32x8xf32>
    %cst_15 = arith.constant dense<0.000000e+00> : vector<1x8xf32>
    %24 = tpu.matmul %22, %23, %cst_15 {dimension_numbers = #tpu.dot_dimension_numbers<[1], [0], [0], [1], [0, 0, 1, 1], [], []>} : vector<1x32xf32>, vector<32x8xf32>, vector<1x8xf32> -> vector<1x8xf32>
    %25 = arith.negf %24 : vector<1x8xf32>
    %26 = math.exp %25 : vector<1x8xf32>
    %cst_16 = arith.constant 1.000000e+00 : f32
    %27 = vector.broadcast %cst_16 : f32 to vector<1x8xf32>
    %28 = arith.addf %27, %26 : vector<1x8xf32>
    %29 = arith.divf %27, %28 : vector<1x8xf32>
    %c0_17 = arith.constant 0 : index
    %c0_18 = arith.constant 0 : index
    %30 = vector.load %arg7[%c0_17, %c0_18] : memref<1x8xf32, #tpu.memory_space<vmem>>, vector<1x8xf32>
    tpu.vector_store %arg7[%c0_17, %c0_18], %29 {strides = array<i32>} : memref<1x8xf32, #tpu.memory_space<vmem>>, vector<1x8xf32>,
    return
  }
  func.func @transform_0(%arg0: i32) -> (i32, i32) {
    %c0_i32 = arith.constant 0 : i32
    %c0_i32_0 = arith.constant 0 : i32
    return %c0_i32, %arg0 : i32, i32
  }
  func.func @transform_1(%arg0: i32) -> (i32, i32) {
    %c0_i32 = arith.constant 0 : i32
    %c0_i32_0 = arith.constant 0 : i32
    %c0_i32_1 = arith.constant 0 : i32
    return %c0_i32, %c0_i32_0 : i32, i32
  }
  func.func @transform_2(%arg0: i32) -> (i32, i32) {
    %c0_i32 = arith.constant 0 : i32
    %c0_i32_0 = arith.constant 0 : i32
    %c0_i32_1 = arith.constant 0 : i32
    return %c0_i32, %c0_i32_0 : i32, i32
  }
  func.func @transform_3(%arg0: i32) -> (i32, i32) {
    %c0_i32 = arith.constant 0 : i32
    %c0_i32_0 = arith.constant 0 : i32
    %c0_i32_1 = arith.constant 0 : i32
    return %c0_i32, %c0_i32_0 : i32, i32
  }
  func.func @transform_4(%arg0: i32) -> (i32, i32) {
    %c0_i32 = arith.constant 0 : i32
    %c0_i32_0 = arith.constant 0 : i32
    %c0_i32_1 = arith.constant 0 : i32
    return %c0_i32, %c0_i32_0 : i32, i32
  }
  func.func @transform_5(%arg0: i32) -> (i32, i32) {
    %c0_i32 = arith.constant 0 : i32
    %c0_i32_0 = arith.constant 0 : i32
    %c0_i32_1 = arith.constant 0 : i32
    return %c0_i32, %c0_i32_0 : i32, i32
  }
  func.func @transform_6(%arg0: i32) -> (i32, i32) {
    %c0_i32 = arith.constant 0 : i32
    %c0_i32_0 = arith.constant 0 : i32
    return %c0_i32, %arg0 : i32, i32
  }
}

</mosaic_0001>

<llo_original>
// kernel: tpu_custom_call.1
$region0: #{tpu_custom_call.1}
  #allocation0 [shape = 'u32[]', space=smem, size = 0x4, offset = 0x4, fixed_abs, tag = 'smem constant byte address 0x4 - core index']
  #allocation1 [shape = 'u32[72,128]{1,0:T(1,128)}', space=vmem, size = 0x9000, scoped, tag = 'internal scratch']
  %s0 = inlined_call_operand.vmem [shape: f32[33,8], index: 0, kind: input, shape index: {}]
  %s1 = inlined_call_operand.vmem [shape: f32[4,33], index: 1, kind: input, shape index: {}]
  %s2 = inlined_call_operand.vmem [shape: f32[64,4], index: 2, kind: input, shape index: {}]
  %s3 = inlined_call_operand.vmem [shape: f32[64,4], index: 3, kind: input, shape index: {}]
  %s4 = inlined_call_operand.vmem [shape: f32[32,16], index: 4, kind: input, shape index: {}]
  %s5 = inlined_call_operand.vmem [shape: f32[1,32], index: 5, kind: input, shape index: {}]
  %s6 = inlined_call_operand.hbm [shape: f32[1,8], index: 6, kind: output, shape index: {}]
  %s7 = sld [smem:[#allocation0]]
  $region34: #{tpu_custom_call.1} parent=0
    _
  %s9 = ssub.s32 1, %s7
  %s10 = scalar_select 0, %s9, %s7
  $region1: #{tpu_custom_call.1} parent=0
    #allocation2 [shape = 'u8[512]{0}', space=vmem, size = 0x400, scoped, tag = 'output window, operand 0, single buffered']
    #allocation3 [shape = 's32[1]{0}', space=sflag, size = 0x4, scoped, tag = 'scoped memory for tpu_custom_call.1']
    %11 = vsyncpa [#allocation3], 0
    // Predicated region
    $region2: #{tpu_custom_call.1} parent=1 // pred_check
      _
    $region3: #{tpu_custom_call.1} parent=1 // pred_check_branch
      %13 = sbr.rel (0) target = $region5
    $region4: #{tpu_custom_call.1} parent=1 // pred_region
      _
    $region5: #{tpu_custom_call.1} parent=1 // pred_fallthru
      _
    // Predicated region
    $region6: #{tpu_custom_call.1} parent=1 // pred_check
      _
    $region7: #{tpu_custom_call.1} parent=1 // pred_check_branch
      %15 = sbr.rel (0) target = $region9
    $region8: #{tpu_custom_call.1} parent=1 // pred_region
      _
    $region9: #{tpu_custom_call.1} parent=1 // pred_fallthru
      _
    // Predicated region
    $region10: #{tpu_custom_call.1} parent=1 // pred_check
      _
    $region11: #{tpu_custom_call.1} parent=1 // pred_check_branch
      %17 = sbr.rel (0) target = $region13
    $region12: #{tpu_custom_call.1} parent=1 // pred_region
      _
    $region13: #{tpu_custom_call.1} parent=1 // pred_fallthru
      _
    // Predicated region
    $region14: #{tpu_custom_call.1} parent=1 // pred_check
      _
    $region15: #{tpu_custom_call.1} parent=1 // pred_check_branch
      %19 = sbr.rel (0) target = $region17
    $region16: #{tpu_custom_call.1} parent=1 // pred_region
      _
    $region17: #{tpu_custom_call.1} parent=1 // pred_fallthru
      _
    // Predicated region
    $region18: #{tpu_custom_call.1} parent=1 // pred_check
      _
    $region19: #{tpu_custom_call.1} parent=1 // pred_check_branch
      %21 = sbr.rel (0) target = $region21
    $region20: #{tpu_custom_call.1} parent=1 // pred_region
      _
    $region21: #{tpu_custom_call.1} parent=1 // pred_fallthru
      _
    // Predicated region
    $region22: #{tpu_custom_call.1} parent=1 // pred_check
      _
    $region23: #{tpu_custom_call.1} parent=1 // pred_check_branch
      %23 = sbr.rel (0) target = $region25
    $region24: #{tpu_custom_call.1} parent=1 // pred_region
      _
    $region25: #{tpu_custom_call.1} parent=1 // pred_fallthru
      _
    %v24 = vld [vmem:[%s1] sm:$0xf]
    %v25 = vld [vmem:[%s0] sm:$0xff]
    %v26 = vld [vmem:[%s0 + $0x8] sm:$0xff]
    %v27 = vld [vmem:[%s0 + $0x10] sm:$0xff]
    %v28 = vld [vmem:[%s0 + $0x18] sm:$0xff]
    %v29 = vld [vmem:[%s0 + $0x20] sm:$0x1]
    %vm30 = vcmask 269312
    %v32 = vsel %vm30, %v24, 0
    %vm34 = vcmask 1040384
    %v36 = vsel %vm34, %v29, 0
    %38 = vmatpush.msra.mxu0 0.0
    %39 = vmatpush.msra.mxu0 0.0
    %40 = vmatpush.msra.mxu0 0.0
    %41 = vmatpush.msra.mxu0 0.0
    %42 = vmatpush.msra.mxu0 0.0
    %43 = vmatpush.msra.mxu0 0.0
    %44 = vmatpush.msra.mxu0 0.0
    %45 = vmatpush.msra.mxu0 0.0
    %46 = vmatpush.msra.mxu0 0.0
    %47 = vmatpush.msra.mxu0 0.0
    %48 = vmatpush.msra.mxu0 0.0
    %49 = vmatpush.msra.mxu0 %v36
    %50 = vmatpush.msra.mxu0 %v28
    %51 = vmatpush.msra.mxu0 %v27
    %52 = vmatpush.msra.mxu0 %v26
    %53 = vmatpush.msra.mxu0 %v25
    %54 = vmatmul.f32.gmra.mxu0 %v32
    %v55 = vpop.f32.mrf.mxu0
    %v56 = vadd.f32 0.0, %v55
    %57 = vdwg.mxu0
    %v58 = vtanh.pop %v56
    %v59 = vmul.f32 %v58, 0.5
    %v60 = vld [vmem:[%s2] sm:$0xff]
    %v61 = vld [vmem:[%s2 + $0x8] sm:$0xff]
    %v62 = vld [vmem:[%s2 + $0x10] sm:$0xff]
    %v63 = vld [vmem:[%s2 + $0x18] sm:$0xff]
    %v64 = vld [vmem:[%s2 + $0x20] sm:$0xff]
    %v65 = vld [vmem:[%s2 + $0x28] sm:$0xff]
    %v66 = vld [vmem:[%s2 + $0x30] sm:$0xff]
    %v67 = vld [vmem:[%s2 + $0x38] sm:$0xff]
    %v68 = vand.u32 2147483647, %v59
    %vm69 = vcmp.le.f32.partialorder %v68, 0.7853982
    %vm70 = vcmp.lt.s32.totalorder %v59, 0
    %v71 = vand.u32 %v59, 2139095040
    %v72 = vshrl.u32 %v71, 23
    %v73 = vsub.s32 %v72, 127
    %v74 = vand.u32 2147483647, %v59
    %v75 = vand.u32 %v74, 8388607
    %v76 = vor.u32 %v75, 8388608
    %v77 = vsub.s32 0, %v76
    %v78 = vadd.s32 %v73, 1
    %vm79 = vcmp.gt.s32.totalorder %v78, 0
    %v80 = vsel %vm79, %v78, 0
    %v81 = vshrl.u32 %v80, 5
    %v82 = vand.u32 %v80, 31
    %v83 = vsub.s32 32, %v82
    %v84 = vshrl.u32 683565275, %v83
    %v85 = vshll.u32 683565275, %v82
    %v86 = vshrl.u32 2475754826, %v83
    %v87 = vor.u32 %v85, %v86
    %v88 = vshll.u32 2475754826, %v82
    %v89 = vshrl.u32 2131351028, %v83
    %v90 = vor.u32 %v88, %v89
    %v91 = vshll.u32 2131351028, %v82
    %v92 = vshrl.u32 2102212464, %v83
    %v93 = vor.u32 %v91, %v92
    %v94 = vshll.u32 2102212464, %v82
    %v95 = vshrl.u32 920167782, %v83
    %v96 = vor.u32 %v94, %v95
    %v97 = vshll.u32 920167782, %v82
    %v98 = vshrl.u32 1326507024, %v83
    %v99 = vor.u32 %v97, %v98
    %vm100 = vcmp.lt.s32.totalorder %v81, 1
    %vm101 = vcmp.lt.s32.totalorder %v81, 2
    %vm102 = vcmp.lt.s32.totalorder %v81, 3
    %vm103 = vcmp.lt.s32.totalorder %v81, 4
    %v104 = vsel %vm100, %v84, %v87
    %v105 = vsel %vm103, %v93, 2102212464
    %v106 = vsel %vm102, %v90, %v105
    %v107 = vsel %vm101, %v104, %v106
    %v108 = vsel %vm100, %v87, %v90
    %v109 = vsel %vm103, %v96, 920167782
    %v110 = vsel %vm102, %v93, %v109
    %v111 = vsel %vm101, %v108, %v110
    %v112 = vsel %vm100, %v90, %v93
    %v113 = vsel %vm103, %v99, 1326507024
    %v114 = vsel %vm102, %v96, %v113
    %v115 = vsel %vm101, %v112, %v114
    %v116 = vshll.u32 %v76, 8
    %v117 = vand.u32 %v116, 65535
    %v118 = vshrl.u32 %v116, 16
    %v119 = vand.u32 %v115, 65535
    %v120 = vshrl.u32 %v115, 16
    %v121 = vmul.u32 %v117, %v119
    %v122 = vmul.u32 %v117, %v120
    %v123 = vmul.u32 %v118, %v119
    %v124 = vmul.u32 %v118, %v120
    %v125 = vshll.u32 %v122, 16
    %v126 = vshrl.u32 %v122, 16
    %v127 = vshll.u32 %v123, 16
    %v128 = vshrl.u32 %v123, 16
    %vm129 = vc.u32 %v121, %v125
    %v130 = vsel %vm129, 1, 0
    %v131 = vadd.s32 %v121, %v125
    %v132 = vadd.s32 %v124, %v130
    %vm133 = vc.u32 %v131, %v127
    %v134 = vsel %vm133, 1, 0
    %v135 = vadd.s32 %v131, %v127
    %v136 = vadd.s32 %v132, %v134
    %v137 = vadd.s32 %v136, %v126
    %v138 = vadd.s32 %v137, %v128
    %v139 = vand.u32 %v116, 65535
    %v140 = vshrl.u32 %v116, 16
    %v141 = vand.u32 %v111, 65535
    %v142 = vshrl.u32 %v111, 16
    %v143 = vmul.u32 %v139, %v141
    %v144 = vmul.u32 %v139, %v142
    %v145 = vmul.u32 %v140, %v141
    %v146 = vmul.u32 %v140, %v142
    %v147 = vshll.u32 %v144, 16
    %v148 = vshrl.u32 %v144, 16
    %v149 = vshll.u32 %v145, 16
    %v150 = vshrl.u32 %v145, 16
    %vm151 = vc.u32 %v143, %v147
    %v152 = vsel %vm151, 1, 0
    %v153 = vadd.s32 %v143, %v147
    %v154 = vadd.s32 %v146, %v152
    %vm155 = vc.u32 %v153, %v149
    %v156 = vsel %vm155, 1, 0
    %v157 = vadd.s32 %v153, %v149
    %v158 = vadd.s32 %v154, %v156
    %v159 = vadd.s32 %v158, %v148
    %v160 = vadd.s32 %v159, %v150
    %v161 = vmul.u32 %v116, %v107
    %v162 = vadd.s32 %v138, %v157
    %vm163 = vc.u32 %v138, %v157
    %v164 = vadd.s32 %v160, 1
    %v165 = vsel %vm163, %v164, %v160
    %v166 = vadd.s32 %v161, %v165
    %v167 = vadd.s32 %v166, 536870912
    %v168 = vshrl.u32 %v167, 30
    %v169 = vshll.u32 %v168, 30
    %v170 = vsub.s32 %v166, %v169
    %vm171 = vcmp.lt.s32.totalorder %v170, 0
    %v172 = vsub.s32 0, %v170
    %v173 = vsel %vm171, %v172, %v170
    %v174 = vclz %v173
    %v175 = vsub.s32 %v174, 2
    %vm176 = vcmp.gt.s32.totalorder 0, %v175
    %v177 = vsel %vm176, 0, %v175
    %v178 = vsub.s32 32, %v177
    %v179 = vshll.u32 %v170, %v177
    %v180 = vshrl.u32 %v162, %v178
    %v181 = vor.u32 %v179, %v180
    %v182 = vsub.s32 4294967266, %v177
    %v183 = vadd.s32 %v182, 127
    %v184 = vshll.u32 %v183, 23
    %v185 = vor.u32 4788187, %v184
    %v186 = vand.u32 2147483647, %v185
    %v188 = vcvt.s32.f32 %v181
    %v189 = vmul.f32 %v188, %v186
    %v190 = vxor.u32 %v189, 2147483648
    %v191 = vsel %vm70, %v190, %v189
    %v192 = vsub.s32 4, %v168
    %v193 = vsel %vm70, %v192, %v168
    %v194 = vsel %vm69, %v59, %v191
    %v195 = vsel %vm69, 0, %v193
    %v196 = vmul.f32 %v194, %v194
    %v197 = vmul.f32 %v196, -0.001358992
    %v198 = vadd.f32 %v197, 0.041655596
    %v199 = vmul.f32 %v196, %v198
    %v200 = vadd.f32 %v199, -0.4999988
    %v201 = vmul.f32 %v196, %v200
    %v202 = vadd.f32 1.0, %v201
    %v203 = vmul.f32 %v194, %v194
    %v204 = vmul.f32 %v203, -0.00019511016
    %v205 = vadd.f32 %v204, 0.008332121
    %v206 = vmul.f32 %v203, %v205
    %v207 = vadd.f32 %v206, -0.16666654
    %v208 = vmul.f32 %v203, %v207
    %v209 = vadd.f32 %v208, 1.0
    %v210 = vmul.f32 %v209, %v194
    %vm211 = vweird.f32 %v59
    %v212 = vand.u32 %v195, 3
    %vm213 = vcmp.lt.s32.totalorder %v212, 2
    %vm214 = vcmp.eq.s32.totalorder %v212, 0
    %v215 = vxor.u32 %v210, 2147483648
    %v216 = vsel %vm214, %v202, %v215
    %vm217 = vcmp.eq.s32.totalorder %v212, 2
    %v218 = vxor.u32 %v202, 2147483648
    %v219 = vsel %vm217, %v218, %v210
    %v220 = vsel %vm213, %v216, %v219
    %v221 = vsel %vm211, nan, %v220
    %v222 = vld [vmem:[%s3] sm:$0xff]
    %v223 = vld [vmem:[%s3 + $0x8] sm:$0xff]
    %v224 = vld [vmem:[%s3 + $0x10] sm:$0xff]
    %v225 = vld [vmem:[%s3 + $0x18] sm:$0xff]
    %v226 = vld [vmem:[%s3 + $0x20] sm:$0xff]
    %v227 = vld [vmem:[%s3 + $0x28] sm:$0xff]
    %v228 = vld [vmem:[%s3 + $0x30] sm:$0xff]
    %v229 = vld [vmem:[%s3 + $0x38] sm:$0xff]
    %v230 = vand.u32 2147483647, %v59
    %vm231 = vcmp.le.f32.partialorder %v230, 0.7853982
    %vm232 = vcmp.lt.s32.totalorder %v59, 0
    %v233 = vand.u32 %v59, 2139095040
    %v234 = vshrl.u32 %v233, 23
    %v235 = vsub.s32 %v234, 127
    %v236 = vand.u32 2147483647, %v59
    %v237 = vand.u32 %v236, 8388607
    %v238 = vor.u32 %v237, 8388608
    %v239 = vsub.s32 0, %v238
    %v240 = vadd.s32 %v235, 1
    %vm241 = vcmp.gt.s32.totalorder %v240, 0
    %v242 = vsel %vm241, %v240, 0
    %v243 = vshrl.u32 %v242, 5
    %v244 = vand.u32 %v242, 31
    %v245 = vsub.s32 32, %v244
    %v246 = vshrl.u32 683565275, %v245
    %v247 = vshll.u32 683565275, %v244
    %v248 = vshrl.u32 2475754826, %v245
    %v249 = vor.u32 %v247, %v248
    %v250 = vshll.u32 2475754826, %v244
    %v251 = vshrl.u32 2131351028, %v245
    %v252 = vor.u32 %v250, %v251
    %v253 = vshll.u32 2131351028, %v244
    %v254 = vshrl.u32 2102212464, %v245
    %v255 = vor.u32 %v253, %v254
    %v256 = vshll.u32 2102212464, %v244
    %v257 = vshrl.u32 920167782, %v245
    %v258 = vor.u32 %v256, %v257
    %v259 = vshll.u32 920167782, %v244
    %v260 = vshrl.u32 1326507024, %v245
    %v261 = vor.u32 %v259, %v260
    %vm262 = vcmp.lt.s32.totalorder %v243, 1
    %vm263 = vcmp.lt.s32.totalorder %v243, 2
    %vm264 = vcmp.lt.s32.totalorder %v243, 3
    %vm265 = vcmp.lt.s32.totalorder %v243, 4
    %v266 = vsel %vm262, %v246, %v249
    %v267 = vsel %vm265, %v255, 2102212464
    %v268 = vsel %vm264, %v252, %v267
    %v269 = vsel %vm263, %v266, %v268
    %v270 = vsel %vm262, %v249, %v252
    %v271 = vsel %vm265, %v258, 920167782
    %v272 = vsel %vm264, %v255, %v271
    %v273 = vsel %vm263, %v270, %v272
    %v274 = vsel %vm262, %v252, %v255
    %v275 = vsel %vm265, %v261, 1326507024
    %v276 = vsel %vm264, %v258, %v275
    %v277 = vsel %vm263, %v274, %v276
    %v278 = vshll.u32 %v238, 8
    %v279 = vand.u32 %v278, 65535
    %v280 = vshrl.u32 %v278, 16
    %v281 = vand.u32 %v277, 65535
    %v282 = vshrl.u32 %v277, 16
    %v283 = vmul.u32 %v279, %v281
    %v284 = vmul.u32 %v279, %v282
    %v285 = vmul.u32 %v280, %v281
    %v286 = vmul.u32 %v280, %v282
    %v287 = vshll.u32 %v284, 16
    %v288 = vshrl.u32 %v284, 16
    %v289 = vshll.u32 %v285, 16
    %v290 = vshrl.u32 %v285, 16
    %vm291 = vc.u32 %v283, %v287
    %v292 = vsel %vm291, 1, 0
    %v293 = vadd.s32 %v283, %v287
    %v294 = vadd.s32 %v286, %v292
    %vm295 = vc.u32 %v293, %v289
    %v296 = vsel %vm295, 1, 0
    %v297 = vadd.s32 %v293, %v289
    %v298 = vadd.s32 %v294, %v296
    %v299 = vadd.s32 %v298, %v288
    %v300 = vadd.s32 %v299, %v290
    %v301 = vand.u32 %v278, 65535
    %v302 = vshrl.u32 %v278, 16
    %v303 = vand.u32 %v273, 65535
    %v304 = vshrl.u32 %v273, 16
    %v305 = vmul.u32 %v301, %v303
    %v306 = vmul.u32 %v301, %v304
    %v307 = vmul.u32 %v302, %v303
    %v308 = vmul.u32 %v302, %v304
    %v309 = vshll.u32 %v306, 16
    %v310 = vshrl.u32 %v306, 16
    %v311 = vshll.u32 %v307, 16
    %v312 = vshrl.u32 %v307, 16
    %vm313 = vc.u32 %v305, %v309
    %v314 = vsel %vm313, 1, 0
    %v315 = vadd.s32 %v305, %v309
    %v316 = vadd.s32 %v308, %v314
    %vm317 = vc.u32 %v315, %v311
    %v318 = vsel %vm317, 1, 0
    %v319 = vadd.s32 %v315, %v311
    %v320 = vadd.s32 %v316, %v318
    %v321 = vadd.s32 %v320, %v310
    %v322 = vadd.s32 %v321, %v312
    %v323 = vmul.u32 %v278, %v269
    %v324 = vadd.s32 %v300, %v319
    %vm325 = vc.u32 %v300, %v319
    %v326 = vadd.s32 %v322, 1
    %v327 = vsel %vm325, %v326, %v322
    %v328 = vadd.s32 %v323, %v327
    %v329 = vadd.s32 %v328, 536870912
    %v330 = vshrl.u32 %v329, 30
    %v331 = vshll.u32 %v330, 30
    %v332 = vsub.s32 %v328, %v331
    %vm333 = vcmp.lt.s32.totalorder %v332, 0
    %v334 = vsub.s32 0, %v332
    %v335 = vsel %vm333, %v334, %v332
    %v336 = vclz %v335
    %v337 = vsub.s32 %v336, 2
    %vm338 = vcmp.gt.s32.totalorder 0, %v337
    %v339 = vsel %vm338, 0, %v337
    %v340 = vsub.s32 32, %v339
    %v341 = vshll.u32 %v332, %v339
    %v342 = vshrl.u32 %v324, %v340
    %v343 = vor.u32 %v341, %v342
    %v344 = vsub.s32 4294967266, %v339
    %v345 = vadd.s32 %v344, 127
    %v346 = vshll.u32 %v345, 23
    %v347 = vor.u32 4788187, %v346
    %v348 = vand.u32 2147483647, %v347
    %v350 = vcvt.s32.f32 %v343
    %v351 = vmul.f32 %v350, %v348
    %v352 = vxor.u32 %v351, 2147483648
    %v353 = vsel %vm232, %v352, %v351
    %v354 = vsub.s32 4, %v330
    %v355 = vsel %vm232, %v354, %v330
    %v356 = vsel %vm231, %v59, %v353
    %v357 = vsel %vm231, 0, %v355
    %v358 = vmul.f32 %v356, %v356
    %v359 = vmul.f32 %v358, -0.001358992
    %v360 = vadd.f32 %v359, 0.041655596
    %v361 = vmul.f32 %v358, %v360
    %v362 = vadd.f32 %v361, -0.4999988
    %v363 = vmul.f32 %v358, %v362
    %v364 = vadd.f32 1.0, %v363
    %v365 = vmul.f32 %v356, %v356
    %v366 = vmul.f32 %v365, -0.00019511016
    %v367 = vadd.f32 %v366, 0.008332121
    %v368 = vmul.f32 %v365, %v367
    %v369 = vadd.f32 %v368, -0.16666654
    %v370 = vmul.f32 %v365, %v369
    %v371 = vadd.f32 %v370, 1.0
    %v372 = vmul.f32 %v371, %v356
    %vm373 = vweird.f32 %v59
    %v374 = vadd.s32 %v357, 3
    %v375 = vand.u32 %v374, 3
    %vm376 = vcmp.lt.s32.totalorder %v375, 2
    %vm377 = vcmp.eq.s32.totalorder %v375, 0
    %v378 = vxor.u32 %v372, 2147483648
    %v379 = vsel %vm377, %v364, %v378
    %vm380 = vcmp.eq.s32.totalorder %v375, 2
    %v381 = vxor.u32 %v364, 2147483648
    %v382 = vsel %vm380, %v381, %v372
    %v383 = vsel %vm376, %v379, %v382
    %v384 = vsel %vm373, nan, %v383
    %vm385 = vcmask 31744
    %v387 = vsel %vm385, %v222, 0
    %v390 = vsel %vm385, %v223, 0
    %v393 = vsel %vm385, %v224, 0
    %v396 = vsel %vm385, %v225, 0
    %v399 = vsel %vm385, %v226, 0
    %v402 = vsel %vm385, %v227, 0
    %v405 = vsel %vm385, %v228, 0
    %v408 = vsel %vm385, %v229, 0
    %vm410 = vcmask 1043456
    %v412 = vsel %vm410, %v384, 0
    %414 = vmatpush.msra.mxu0 0.0
    %415 = vmatpush.msra.mxu0 0.0
    %416 = vmatpush.msra.mxu0 0.0
    %417 = vmatpush.msra.mxu0 0.0
    %418 = vmatpush.msra.mxu0 0.0
    %419 = vmatpush.msra.mxu0 0.0
    %420 = vmatpush.msra.mxu0 0.0
    %421 = vmatpush.msra.mxu0 0.0
    %422 = vmatpush.msra.mxu0 0.0
    %423 = vmatpush.msra.mxu0 0.0
    %424 = vmatpush.msra.mxu0 0.0
    %425 = vmatpush.msra.mxu0 0.0
    %426 = vmatpush.msra.mxu0 0.0
    %427 = vmatpush.msra.mxu0 0.0
    %428 = vmatpush.msra.mxu0 0.0
    %429 = vmatpush.msra.mxu0 %v412
    %430 = vmatmul.f32.gmra.mxu0 %v387
    %v431 = vpop.f32.mrf.mxu0
    %v432 = vadd.f32 0.0, %v431
    %433 = vmatmul.f32.gmra.mxu0 %v390
    %v434 = vpop.f32.mrf.mxu0
    %v435 = vadd.f32 0.0, %v434
    %436 = vmatmul.f32.gmra.mxu0 %v393
    %v437 = vpop.f32.mrf.mxu0
    %v438 = vadd.f32 0.0, %v437
    %439 = vmatmul.f32.gmra.mxu0 %v396
    %v440 = vpop.f32.mrf.mxu0
    %v441 = vadd.f32 0.0, %v440
    %442 = vmatmul.f32.gmra.mxu0 %v399
    %v443 = vpop.f32.mrf.mxu0
    %v444 = vadd.f32 0.0, %v443
    %445 = vmatmul.f32.gmra.mxu0 %v402
    %v446 = vpop.f32.mrf.mxu0
    %v447 = vadd.f32 0.0, %v446
    %448 = vmatmul.f32.gmra.mxu0 %v405
    %v449 = vpop.f32.mrf.mxu0
    %v450 = vadd.f32 0.0, %v449
    %451 = vmatmul.f32.gmra.mxu0 %v408
    %v452 = vpop.f32.mrf.mxu0
    %v453 = vadd.f32 0.0, %v452
    %454 = vdwg.mxu0
    %v456 = vsel %vm385, %v60, 0
    %v459 = vsel %vm385, %v61, 0
    %v462 = vsel %vm385, %v62, 0
    %v465 = vsel %vm385, %v63, 0
    %v468 = vsel %vm385, %v64, 0
    %v471 = vsel %vm385, %v65, 0
    %v474 = vsel %vm385, %v66, 0
    %v477 = vsel %vm385, %v67, 0
    %v480 = vsel %vm410, %v221, 0
    %482 = vmatpush.msra.mxu0 0.0
    %483 = vmatpush.msra.mxu0 0.0
    %484 = vmatpush.msra.mxu0 0.0
    %485 = vmatpush.msra.mxu0 0.0
    %486 = vmatpush.msra.mxu0 0.0
    %487 = vmatpush.msra.mxu0 0.0
    %488 = vmatpush.msra.mxu0 0.0
    %489 = vmatpush.msra.mxu0 0.0
    %490 = vmatpush.msra.mxu0 0.0
    %491 = vmatpush.msra.mxu0 0.0
    %492 = vmatpush.msra.mxu0 0.0
    %493 = vmatpush.msra.mxu0 0.0
    %494 = vmatpush.msra.mxu0 0.0
    %495 = vmatpush.msra.mxu0 0.0
    %496 = vmatpush.msra.mxu0 0.0
    %497 = vmatpush.msra.mxu0 %v480
    %498 = vmatmul.f32.gmra.mxu0 %v456
    %v499 = vpop.f32.mrf.mxu0
    %v500 = vadd.f32 %v432, %v499
    %501 = vmatmul.f32.gmra.mxu0 %v459
    %v502 = vpop.f32.mrf.mxu0
    %v503 = vadd.f32 %v435, %v502
    %504 = vmatmul.f32.gmra.mxu0 %v462
    %v505 = vpop.f32.mrf.mxu0
    %v506 = vadd.f32 %v438, %v505
    %507 = vmatmul.f32.gmra.mxu0 %v465
    %v508 = vpop.f32.mrf.mxu0
    %v509 = vadd.f32 %v441, %v508
    %510 = vmatmul.f32.gmra.mxu0 %v468
    %v511 = vpop.f32.mrf.mxu0
    %v512 = vadd.f32 %v444, %v511
    %513 = vmatmul.f32.gmra.mxu0 %v471
    %v514 = vpop.f32.mrf.mxu0
    %v515 = vadd.f32 %v447, %v514
    %516 = vmatmul.f32.gmra.mxu0 %v474
    %v517 = vpop.f32.mrf.mxu0
    %v518 = vadd.f32 %v450, %v517
    %519 = vmatmul.f32.gmra.mxu0 %v477
    %v520 = vpop.f32.mrf.mxu0
    %v521 = vadd.f32 %v453, %v520
    %522 = vdwg.mxu0
    %v523 = vmul.f32 %v500, %v506
    %v524 = vmul.f32 %v503, %v509
    %v525 = vmul.f32 %v523, %v512
    %v526 = vmul.f32 %v524, %v515
    %v527 = vmul.f32 %v525, %v518
    %v528 = vmul.f32 %v526, %v521
    %v529 = vld [vmem:[%s4] sm:$0xff]
    %v530 = vld [vmem:[%s4 + $0x8] sm:$0xff]
    %v531 = vld [vmem:[%s4 + $0x10] sm:$0xff]
    %v532 = vld [vmem:[%s4 + $0x18] sm:$0xff]
    %vm533 = vcmask 130048
    %v535 = vsel %vm533, %v529, 0
    %v538 = vsel %vm533, %v530, 0
    %v541 = vsel %vm533, %v531, 0
    %v544 = vsel %vm533, %v532, 0
    %546 = vmatpush.msra.mxu0 0.0
    %547 = vmatpush.msra.mxu0 0.0
    %548 = vmatpush.msra.mxu0 0.0
    %549 = vmatpush.msra.mxu0 0.0
    %550 = vmatpush.msra.mxu0 0.0
    %551 = vmatpush.msra.mxu0 0.0
    %552 = vmatpush.msra.mxu0 0.0
    %553 = vmatpush.msra.mxu0 0.0
    %554 = vmatpush.msra.mxu0 0.0
    %555 = vmatpush.msra.mxu0 0.0
    %556 = vmatpush.msra.mxu0 0.0
    %557 = vmatpush.msra.mxu0 0.0
    %558 = vmatpush.msra.mxu0 0.0
    %559 = vmatpush.msra.mxu0 0.0
    %560 = vmatpush.msra.mxu0 %v528
    %561 = vmatpush.msra.mxu0 %v527
    %562 = vmatmul.f32.gmra.mxu0 %v535
    %v563 = vpop.f32.mrf.mxu0
    %v564 = vadd.f32 0.0, %v563
    %565 = vmatmul.f32.gmra.mxu0 %v538
    %v566 = vpop.f32.mrf.mxu0
    %v567 = vadd.f32 0.0, %v566
    %568 = vmatmul.f32.gmra.mxu0 %v541
    %v569 = vpop.f32.mrf.mxu0
    %v570 = vadd.f32 0.0, %v569
    %571 = vmatmul.f32.gmra.mxu0 %v544
    %v572 = vpop.f32.mrf.mxu0
    %v573 = vadd.f32 0.0, %v572
    %574 = vdwg.mxu0
    %v575 = vld [vmem:[%s5] sm:$0x1]
    %v576 = vmul.f32 %v564, %v564
    %v577 = vmul.f32 %v567, %v567
    %v578 = vmul.f32 %v570, %v570
    %v579 = vmul.f32 %v573, %v573
    %vm580 = vcmask 261120
    %v582 = vsel %vm580, %v575, 0
    %584 = vmatpush.msra.mxu0 0.0
    %585 = vmatpush.msra.mxu0 0.0
    %586 = vmatpush.msra.mxu0 0.0
    %587 = vmatpush.msra.mxu0 0.0
    %588 = vmatpush.msra.mxu0 0.0
    %589 = vmatpush.msra.mxu0 0.0
    %590 = vmatpush.msra.mxu0 0.0
    %591 = vmatpush.msra.mxu0 0.0
    %592 = vmatpush.msra.mxu0 0.0
    %593 = vmatpush.msra.mxu0 0.0
    %594 = vmatpush.msra.mxu0 0.0
    %595 = vmatpush.msra.mxu0 0.0
    %596 = vmatpush.msra.mxu0 %v579
    %597 = vmatpush.msra.mxu0 %v578
    %598 = vmatpush.msra.mxu0 %v577
    %599 = vmatpush.msra.mxu0 %v576
    %600 = vmatmul.f32.gmra.mxu0 %v582
    %v601 = vpop.f32.mrf.mxu0
    %v602 = vadd.f32 0.0, %v601
    %603 = vdwg.mxu0
    %v604 = vxor.u32 %v602, 2147483648
    %v605 = vmul.f32 %v604, 1.442695
    %v606 = vpow.pop %v605
    %v607 = vadd.f32 %v606, 1.0
    %v608 = vrcp.pop %v607
    %v609 = vmul.f32 %v607, %v608
    %v610 = vsub.f32 1.0, %v609
    %v611 = vmul.f32 %v608, %v610
    %v612 = vadd.f32 %v608, %v611
    %vm613 = vweird.f32 %v607
    %vm614 = vweird.f32 %v608
    %vm615 = vmor %vm613, %vm614
    %v616 = vsel %vm615, %v608, %v612
    %v617 = vand.u32 2147483647, %v607
    %vm618 = vcmp.eq.f32.partialorder %v617, 8.507059e+37
    %v619 = vand.u32 %v607, 2147483648
    %v620 = vor.u32 1.1754944e-38, %v619
    %v621 = vsel %vm618, %v620, %v616
    %v622 = vmul.f32 1.0, %v621
    %vm623 = vcmask 57344
    %624 = vst.msk [vmem:[#allocation2] sm:$0x1] %vm623, %v622
    // Predicated region
    $region26: #{tpu_custom_call.1} parent=1 // pred_check
      _
    $region27: #{tpu_custom_call.1} parent=1 // pred_check_branch
      %626 = sbr.rel (0) target = $region29
    $region28: #{tpu_custom_call.1} parent=1 // pred_region
      %628 = vsyncadd [#allocation3], 0
      %s630 = sshll.u32 [#allocation2], 4
      %s631 = int_to_ptr.vmem [resolvable:$true] %s630
      %s632 = sshll.u32 %s6, 4
      %s633 = int_to_ptr.hbm [resolvable:$true] %s632
      %635 = dma.vmem_to_hbm [thread:$0]  %s631, 16, %s633, [#allocation3]
    $region29: #{tpu_custom_call.1} parent=1 // pred_fallthru
      _
    // Predicated region
    $region30: #{tpu_custom_call.1} parent=1 // pred_check
      _
    $region31: #{tpu_custom_call.1} parent=1 // pred_check_branch
      %637 = sbr.rel (0) target = $region33
    $region32: #{tpu_custom_call.1} parent=1 // pred_region
      %639 = dma.done [#allocation3], 16
    $region33: #{tpu_custom_call.1} parent=1 // pred_fallthru
      _
    %640 = vsyncpa [#allocation3], 1

</llo_original>
